<compile_context>
chip_gen: v6e
topology: v6e:2x2x1
jax: 0.10.0
libtpu: 0.0.40
codegen_flags: <defaults>
</compile_context>

<pallas_src>
import functools
import math

import jax
import jax.numpy as jnp
from jax.experimental import pallas as pl
from jax.experimental.pallas import tpu as pltpu


_TARGET_BLOCK_BYTES = 2 * 1024 * 1024   # ~2 MiB blocks: fine on v5e/v6e/v7x
_TC_MAX = 4096                          # lane-dim cap per tile


def _round_up(n: int, m: int) -> int:
    return ((n + m - 1) // m) * m


def _sublane_multiple(dtype) -> int:
    # 8 for 32-bit, 16 for 16-bit, 32 for 8-bit dtypes (sublane packing).
    itemsize = jnp.dtype(dtype).itemsize
    return 8 * max(1, 4 // itemsize)


# ---------------------------------------------------------------------------
# Tiling helpers (pure Python, static shapes)
# ---------------------------------------------------------------------------
def _choose_uniform_slab(shape):
    """Free (rows, cols) factorization of a contiguous array (rows*cols == n)."""
    n = int(math.prod(shape)) if len(shape) else 1
    n = max(n, 1)
    cands = set()
    p = 1
    for d in reversed(shape):
        p *= int(d)
        if p >= 1:
            cands.add(p)
    cands.add(n)
    for c in (8192, 4096, 2048, 1024, 512, 256, 128):
        if n % c == 0:
            cands.add(c)

    def score(c):
        r = n // c
        s = 0
        if c % 128 == 0:
            s += 4            # lane-dense stores
        if 128 <= c <= 8192:
            s += 2            # reasonable lane extent
        if r >= 8:
            s += 1            # fill sublanes / allow row tiling
        return (s, -abs(c - 2048))

    cols = max(cands, key=score)
    return n // cols, cols


def _tile_dims(rows, cols, dtype):
    sub = _sublane_multiple(dtype)
    itemsize = jnp.dtype(dtype).itemsize
    if cols <= 128:
        tc = max(cols, 1)                       # equal to full dim
    else:
        tc = min(_round_up(cols, 128), _TC_MAX)
    if rows <= sub:
        tr = max(rows, 1)                       # equal to full dim
    else:
        tr_target = max(sub, _TARGET_BLOCK_BYTES // max(1, tc * itemsize))
        tr = _round_up(min(tr_target, rows), sub)
    return tr, tc


def _ensure_two_programs(rows, cols, tr, tc, sub):
    """Best-effort: >=2 grid programs so both v7x TensorCores get work."""
    if pl.cdiv(rows, tr) * pl.cdiv(cols, tc) >= 2:
        return tr, tc
    if rows > sub and tr > sub:
        tr_half = _round_up(max(sub, (tr + 1) // 2), sub)
        if pl.cdiv(rows, tr_half) >= 2:
            return tr_half, tc
    if cols > 128 and tc > 128:
        tc_half = _round_up(max(128, (tc + 1) // 2), 128)
        if pl.cdiv(cols, tc_half) >= 2:
            return tr, tc_half
    return tr, tc


# ---------------------------------------------------------------------------
# Kernels
# ---------------------------------------------------------------------------
def _scale_uniform_kernel(scale_ref, x_ref, o_ref):
    # scale_ref: (1, 1) f32 in SMEM; x_ref / o_ref: (TR, TC) VMEM tiles.
    s = scale_ref[0, 0].astype(x_ref.dtype)
    o_ref[...] = x_ref[...] * s


def _scale_rows_kernel(scale_ref, x_ref, o_ref):
    # scale_ref: (TR, 1) f32 VMEM tile, broadcast over the column tile.
    o_ref[...] = x_ref[...] * scale_ref[...].astype(x_ref.dtype)


def _scale_elementwise_kernel(scale_ref, x_ref, o_ref):
    # Full elementwise product: both tiles are (TR, TC) in x.dtype.
    o_ref[...] = x_ref[...] * scale_ref[...]


# ---------------------------------------------------------------------------
# Jitted path wrappers (reshape + pallas_call + reshape back in one XLA exec)
# ---------------------------------------------------------------------------
@functools.partial(jax.jit, static_argnames=("rows", "cols", "tr", "tc"))
def _uniform_forward(scalar, x, *, rows, cols, tr, tc):
    n = rows * cols
    itemsize = jnp.dtype(x.dtype).itemsize
    x2d = x.reshape(rows, cols)
    s11 = scalar.reshape(-1)[:1].astype(jnp.float32).reshape(1, 1)
    grid = (pl.cdiv(rows, tr), pl.cdiv(cols, tc))
    out2d = pl.pallas_call(
        _scale_uniform_kernel,
        out_shape=jax.ShapeDtypeStruct((rows, cols), x.dtype),
        grid=grid,
        in_specs=[
            pl.BlockSpec(memory_space=pltpu.MemorySpace.SMEM),   # (1,1) f32
            pl.BlockSpec((tr, tc), lambda i, j: (i, j)),         # x tile
        ],
        out_specs=pl.BlockSpec((tr, tc), lambda i, j: (i, j)),
        compiler_params=pltpu.CompilerParams(
            dimension_semantics=("parallel", "parallel")),
        cost_estimate=pl.CostEstimate(
            flops=n, transcendentals=0, bytes_accessed=2 * n * itemsize),
    )(s11, x2d)
    return out2d.reshape(x.shape)


@functools.partial(jax.jit, static_argnames=("rows", "cols", "tr", "tc", "k"))
def _rowwise_forward(scalar, x, *, rows, cols, tr, tc, k):
    n = rows * cols
    itemsize = jnp.dtype(x.dtype).itemsize
    lead_shape = x.shape[:k + 1]
    scale_col = jnp.broadcast_to(
        scalar.reshape(scalar.shape[:k + 1]).astype(jnp.float32),
        lead_shape).reshape(rows, 1)
    x2d = x.reshape(rows, cols)
    grid = (pl.cdiv(rows, tr), pl.cdiv(cols, tc))
    out2d = pl.pallas_call(
        _scale_rows_kernel,
        out_shape=jax.ShapeDtypeStruct((rows, cols), x.dtype),
        grid=grid,
        in_specs=[
            pl.BlockSpec((tr, 1), lambda i, j: (i, 0)),      # per-row scale
            pl.BlockSpec((tr, tc), lambda i, j: (i, j)),     # x tile
        ],
        out_specs=pl.BlockSpec((tr, tc), lambda i, j: (i, j)),
        compiler_params=pltpu.CompilerParams(
            dimension_semantics=("parallel", "parallel")),
        cost_estimate=pl.CostEstimate(
            flops=n, transcendentals=0,
            bytes_accessed=2 * n * itemsize + rows * 4),
    )(scale_col, x2d)
    return out2d.reshape(x.shape)


@functools.partial(jax.jit, static_argnames=("rows", "cols", "tr", "tc"))
def _elementwise_forward(scalar, x, *, rows, cols, tr, tc):
    n = rows * cols
    itemsize = jnp.dtype(x.dtype).itemsize
    target_shape = tuple(scalar.shape) + (1,) * (x.ndim - scalar.ndim)
    scale2d = jnp.broadcast_to(scalar.reshape(target_shape),
                               x.shape).reshape(rows, cols)
    x2d = x.reshape(rows, cols)
    grid = (pl.cdiv(rows, tr), pl.cdiv(cols, tc))
    out2d = pl.pallas_call(
        _scale_elementwise_kernel,
        out_shape=jax.ShapeDtypeStruct((rows, cols), x.dtype),
        grid=grid,
        in_specs=[
            pl.BlockSpec((tr, tc), lambda i, j: (i, j)),   # scale tile
            pl.BlockSpec((tr, tc), lambda i, j: (i, j)),   # x tile
        ],
        out_specs=pl.BlockSpec((tr, tc), lambda i, j: (i, j)),
        compiler_params=pltpu.CompilerParams(
            dimension_semantics=("parallel", "parallel")),
        cost_estimate=pl.CostEstimate(
            flops=n, transcendentals=0, bytes_accessed=3 * n * itemsize),
    )(scale2d, x2d)
    return out2d.reshape(x.shape)


# ---------------------------------------------------------------------------
# Module
# ---------------------------------------------------------------------------
class ScalarLinearOperator:
    """JAX/Pallas port of gmi.linalg.core.ScalarLinearOperator (forward only)."""

    def __init__(self, scalar):
        self.scalar = jnp.asarray(scalar)

    def forward(self, x):
        scalar = self.scalar.astype(x.dtype)

        # Shape assertions mirroring the PyTorch module.
        for i, s in enumerate(scalar.shape):
            assert x.shape[i] == s or s == 1, (
                "The input tensor shape does not match the scalar shape.")

        if x.size == 0:
            return x

        # Last dim along which the scalar actually varies.
        k = -1
        for i, s in enumerate(scalar.shape):
            if s != 1:
                k = i

        sub = _sublane_multiple(x.dtype)

        if k < 0:
            # 0-d / all-ones scalar: uniform scale, scalar in SMEM.
            rows, cols = _choose_uniform_slab(x.shape)
            tr, tc = _tile_dims(rows, cols, x.dtype)
            tr, tc = _ensure_two_programs(rows, cols, tr, tc, sub)
            return _uniform_forward(scalar, x, rows=rows, cols=cols,
                                    tr=tr, tc=tc)

        rows = int(math.prod(x.shape[:k + 1]))
        cols = x.size // rows

        if cols < 128:
            # Scalar varies along (nearly) all dims: plain two-operand
            # elementwise product on a lane-dense slab (no 1->128 padding).
            erows, ecols = _choose_uniform_slab(x.shape)
            tr, tc = _tile_dims(erows, ecols, x.dtype)
            tr, tc = _ensure_two_programs(erows, ecols, tr, tc, sub)
            return _elementwise_forward(scalar, x, rows=erows, cols=ecols,
                                        tr=tr, tc=tc)

        # Row-wise path: scale block (tr, 1) broadcast across the column tile.
        tr, tc = _tile_dims(rows, cols, x.dtype)
        tr, tc = _ensure_two_programs(rows, cols, tr, tc, sub)
        return _rowwise_forward(scalar, x, rows=rows, cols=cols,
                                tr=tr, tc=tc, k=k)

    __call__ = forward


# ---------------------------------------------------------------------------
# Self-test
# ---------------------------------------------------------------------------
if __name__ == "__main__":
    key = jax.random.PRNGKey(0)
    x = jax.random.normal(key, (2, 4, 16, 16), dtype=jnp.float32)  # NCHW

    # Case 1: plain float scalar (typical usage) -> SMEM uniform path.
    op = ScalarLinearOperator(2.5)
    y = op(x)
    jax.block_until_ready(y)
    assert y.shape == x.shape
    assert jnp.allclose(y, 2.5 * x, atol=1e-6), "float-scalar case mismatch"

    # Case 2: tensor scalar broadcasting over leading dims (shape (2, 1)).
    scal = jnp.array([[0.5], [-3.0]], dtype=jnp.float32)
    op2 = ScalarLinearOperator(scal)
    y2 = op2(x)
    jax.block_until_ready(y2)
    ref2 = scal.reshape(2, 1, 1, 1) * x
    assert jnp.allclose(y2, ref2, atol=1e-6), "tensor-scalar case mismatch"

    # Case 3: non-multiple-of-128 trailing extent (ragged edge, no padding).
    x3 = jax.random.normal(jax.random.PRNGKey(1), (3, 5, 20, 20),
                           dtype=jnp.float32)
    scal3 = jnp.arange(1.0, 4.0, dtype=jnp.float32)  # shape (3,)
    op3 = ScalarLinearOperator(scal3)
    y3 = op3(x3)
    jax.block_until_ready(y3)
    ref3 = scal3.reshape(3, 1, 1, 1) * x3
    assert jnp.allclose(y3, ref3, atol=1e-6), "ragged tensor-scalar mismatch"

    # Case 4: scalar with the same shape as x -> dedicated elementwise kernel.
    scal4 = jax.random.normal(jax.random.PRNGKey(2), x.shape,
                              dtype=jnp.float32)
    op4 = ScalarLinearOperator(scal4)
    y4 = op4(x)
    jax.block_until_ready(y4)
    assert jnp.allclose(y4, scal4 * x, atol=1e-6), "elementwise case mismatch"

    # Case 5: bf16 input, uniform scalar (dtype-aware tiling, f32 SMEM scalar).
    x5 = jax.random.normal(jax.random.PRNGKey(3), (4, 8, 32, 32),
                           dtype=jnp.bfloat16)
    op5 = ScalarLinearOperator(2.5)
    y5 = op5(x5)
    jax.block_until_ready(y5)
    ref5 = (x5.astype(jnp.float32) * 2.5).astype(jnp.bfloat16)
    assert jnp.allclose(y5.astype(jnp.float32), ref5.astype(jnp.float32),
                        rtol=2e-2, atol=2e-2), "bf16 uniform case mismatch"

    print("KERNEL_OK")
</pallas_src>

<mosaic_0001>
module attributes {stable_mosaic.version = 11 : i64} {
  func.func @_scale_uniform_kernel(%arg0: i32, %arg1: i32, %arg2: memref<1x1xf32, #tpu.memory_space<smem>>, %arg3: memref<8x128xf32, #tpu.memory_space<vmem>>, %arg4: memref<8x128xf32, #tpu.memory_space<vmem>>) attributes {dimension_semantics = [#tpu.dimension_semantics<parallel>, #tpu.dimension_semantics<parallel>], iteration_bounds = array<i64: 1, 2>, scalar_prefetch = 0 : i64, scratch_operands = 0 : i64, tpu.core_type = #tpu.core_type<tc>, window_params = [{transform_indices = @transform_0, window_bounds = array<i64: 1, 1>}, {transform_indices = @transform_1, window_bounds = array<i64: 8, 128>}, {transform_indices = @transform_2, window_bounds = array<i64: 8, 128>}]} {
    %c0 = arith.constant 0 : index
    %c0_0 = arith.constant 0 : index
    %0 = memref.load %arg2[%c0, %c0_0] : memref<1x1xf32, #tpu.memory_space<smem>>
    %c0_1 = arith.constant 0 : index
    %c0_2 = arith.constant 0 : index
    %1 = vector.load %arg3[%c0_1, %c0_2] : memref<8x128xf32, #tpu.memory_space<vmem>>, vector<8x128xf32>
    %2 = vector.broadcast %0 : f32 to vector<8x128xf32>
    %3 = arith.mulf %1, %2 : vector<8x128xf32>
    %c0_3 = arith.constant 0 : index
    %c0_4 = arith.constant 0 : index
    %4 = vector.load %arg4[%c0_3, %c0_4] : memref<8x128xf32, #tpu.memory_space<vmem>>, vector<8x128xf32>
    tpu.vector_store %arg4[%c0_3, %c0_4], %3 {strides = array<i32>} : memref<8x128xf32, #tpu.memory_space<vmem>>, vector<8x128xf32>,
    return
  }
  func.func @transform_0(%arg0: i32, %arg1: i32) -> (i32, i32) {
    %c0_i32 = arith.constant 0 : i32
    %c0_i32_0 = arith.constant 0 : i32
    %c0_i32_1 = arith.constant 0 : i32
    return %c0_i32, %c0_i32_0 : i32, i32
  }
  func.func @transform_1(%arg0: i32, %arg1: i32) -> (i32, i32) {
    %c0_i32 = arith.constant 0 : i32
    return %arg0, %arg1 : i32, i32
  }
  func.func @transform_2(%arg0: i32, %arg1: i32) -> (i32, i32) {
    %c0_i32 = arith.constant 0 : i32
    return %arg0, %arg1 : i32, i32
  }
}

</mosaic_0001>

<llo_original>
// kernel: _uniform_forward.1
$region0: #{_uniform_forward.1}
  #allocation0 [shape = 'u32[]', space=smem, size = 0x4, offset = 0x4, fixed_abs, tag = 'smem constant byte address 0x4 - core index']
  #allocation1 [shape = 'u32[144,128]{1,0:T(1,128)}', space=vmem, size = 0x12000, scoped, tag = 'internal scratch']
  #allocation2 [shape = 'f32[1,1]{1,0:T(1,128)S(6)}', space=smem, size = 0x200, scoped, tag = 'scoped memory for _uniform_forward.1']
  %s0 = inlined_call_operand.<no memory space> [shape: f32[1,1], index: 0, kind: input, shape index: {}]
  %s1 = inlined_call_operand.vmem [shape: f32[8,256], index: 1, kind: input, shape index: {}]
  %s2 = inlined_call_operand.vmem [shape: f32[8,256], index: 2, kind: output, shape index: {}]
  %s3 = sld [smem:[#allocation0]]
  $region41: #{_uniform_forward.1} parent=0
    _
  %s5 = ssub.s32 1, %s3
  %s6 = scalar_select 0, %s5, %s3
  %7 = sst [smem:[#allocation2]] %s0
  loop: start=0, step=1, limit=4
  $region2: #{_uniform_forward.1} parent=0 // loop_pre_header
    _
  $region3: #{_uniform_forward.1} parent=0 // loop_header
    %s9 = sphi 0, %s13
    %p10 = scmp.ge.s32.totalorder %s9, 4
    %s16 = sphi 0, %s28
    %s17 = sphi 0, %s24
    %s18 = sphi 0, %s16
    %s19 = sphi 0, %s17
    %s20 = sphi 0, %s18
    %s21 = sphi 0, %s19
    %s29 = sphi 0, %s29
    %s31 = sphi 0, %s29
    %s32 = sphi 0, %s31
    %s46 = sphi 0, %s32
    %s54 = sphi 0, %s56
    %s57 = sphi 0, %s54
    %s58 = sphi 0, %s57
    %s74 = sphi 0, %s58
    %s82 = sphi 0, %s84
    %s85 = sphi 0, %s82
    %s86 = sphi 0, %s85
    %s102 = sphi 0, %s86
  $region4: #{_uniform_forward.1} parent=0 // loop_header_branch
    %12 = sbr.rel (%p10) target = $region8
  $region5: #{_uniform_forward.1} parent=0 // loop_body
    %s14 = ssub.s32 %s9, 1
    %s15 = ssub.s32 %s9, 2
    %s22 = sadd.s32 1, %s17
    %p23 = scmp.ge.s32.totalorder %s22, 2
    %s24 = scalar_select %p23, 0, %s22
    %s25 = sadd.s32 1, %s16
    %s26 = scalar_select %p23, %s25, %s16
    %p27 = scmp.ge.s32.totalorder %s26, 1
    %s28 = scalar_select %p27, 0, %s26
    %s30 = sadd.s32 %s29, 1
    %p33 = scmp.eq.s32.totalorder %s9, 1
    %p34 = scmp.ne.s32.totalorder %s29, %s31
    %p35 = scmp.eq.s32.totalorder %s9, 0
    %p36 = por %p34, %p35
    %p37 = scmp.ne.s32.totalorder %s29, %s31
    %p38 = scmp.eq.s32.totalorder %s14, 1
    %p39 = por %p37, %p38
    %p40 = scmp.ne.s32.totalorder %s31, %s32
    %p41 = scmp.eq.s32.totalorder %s14, 0
    %p42 = por %p40, %p41
    %p43 = scmp.ne.s32.totalorder %s31, %s32
    %p44 = scmp.eq.s32.totalorder %s15, 1
    %p45 = por %p43, %p44
    %p47 = scmp.ne.s32.totalorder %s32, %s46
    %p48 = scmp.eq.s32.totalorder %s15, 0
    %p49 = por %p47, %p48
    %s50 = ssub.s32 %s16, %s28
    %s51 = ssub.s32 %s17, %s24
    %s52 = sor.u32 %s50, %s51
    %p53 = scmp.eq.s32.totalorder %s52, 0
    %s55 = sadd.s32 %s54, 1
    %s56 = scalar_select %p53, %s54, %s55
    %p59 = pneg %p53
    %p60 = scmp.eq.s32.totalorder %s9, 1
    %p61 = por %p59, %p60
    %p62 = scmp.ne.s32.totalorder %s54, %s57
    %p63 = scmp.eq.s32.totalorder %s9, 0
    %p64 = por %p62, %p63
    %p65 = scmp.ne.s32.totalorder %s54, %s57
    %p66 = scmp.eq.s32.totalorder %s14, 1
    %p67 = por %p65, %p66
    %p68 = scmp.ne.s32.totalorder %s57, %s58
    %p69 = scmp.eq.s32.totalorder %s14, 0
    %p70 = por %p68, %p69
    %p71 = scmp.ne.s32.totalorder %s57, %s58
    %p72 = scmp.eq.s32.totalorder %s15, 1
    %p73 = por %p71, %p72
    %p75 = scmp.ne.s32.totalorder %s58, %s74
    %p76 = scmp.eq.s32.totalorder %s15, 0
    %p77 = por %p75, %p76
    %s78 = ssub.s32 %s16, %s28
    %s79 = ssub.s32 %s17, %s24
    %s80 = sor.u32 %s78, %s79
    %p81 = scmp.eq.s32.totalorder %s80, 0
    %s83 = sadd.s32 %s82, 1
    %s84 = scalar_select %p81, %s82, %s83
    %p87 = pneg %p81
    %p88 = scmp.eq.s32.totalorder %s9, 1
    %p89 = por %p87, %p88
    %p90 = scmp.ne.s32.totalorder %s82, %s85
    %p91 = scmp.eq.s32.totalorder %s9, 0
    %p92 = por %p90, %p91
    %p93 = scmp.ne.s32.totalorder %s82, %s85
    %p94 = scmp.eq.s32.totalorder %s14, 1
    %p95 = por %p93, %p94
    %p96 = scmp.ne.s32.totalorder %s85, %s86
    %p97 = scmp.eq.s32.totalorder %s14, 0
    %p98 = por %p96, %p97
    %p99 = scmp.ne.s32.totalorder %s85, %s86
    %p100 = scmp.eq.s32.totalorder %s15, 1
    %p101 = por %p99, %p100
    %p103 = scmp.ne.s32.totalorder %s86, %s102
    %p104 = scmp.eq.s32.totalorder %s15, 0
    %p105 = por %p103, %p104
    %p106 = scmp.le.s32.totalorder 1, %s9
    %p107 = scmp.lt.s32.totalorder %s9, 3
    %p108 = pnand %p106, %p107
    %p109 = pneg %p108
    // Predicated region
    $region9: #{_uniform_forward.1} parent=5 // pred_check
      _
    $region10: #{_uniform_forward.1} parent=5 // pred_check_branch
      %111 = sbr.rel (%p108) target = $region12
    $region11: #{_uniform_forward.1} parent=5 // pred_region
      %s112 = ssub.s32 %s9, 1
      // Predicated region
      $region13: #{_uniform_forward.1} parent=11 // pred_check
        %p113 = pneg %p42
      $region14: #{_uniform_forward.1} parent=11 // pred_check_branch
        %115 = sbr.rel (%p113) target = $region16
      $region15: #{_uniform_forward.1} parent=11 // pred_region
        _
      $region16: #{_uniform_forward.1} parent=11 // pred_fallthru
        _
    $region12: #{_uniform_forward.1} parent=5 // pred_fallthru
      _
    %p116 = scmp.lt.s32.totalorder %s9, 2
    // Predicated region
    $region17: #{_uniform_forward.1} parent=5 // pred_check
      %p117 = pneg %p116
    $region18: #{_uniform_forward.1} parent=5 // pred_check_branch
      %119 = sbr.rel (%p117) target = $region20
    $region19: #{_uniform_forward.1} parent=5 // pred_region
      // Predicated region
      $region21: #{_uniform_forward.1} parent=19 // pred_check
        %p120 = pneg %p64
      $region22: #{_uniform_forward.1} parent=19 // pred_check_branch
        %122 = sbr.rel (%p120) target = $region24
      $region23: #{_uniform_forward.1} parent=19 // pred_region
        %p123 = scmp.lt.s32.totalorder %s16, 0
        %s124 = scalar_select %p123, %s16, 0
        %p125 = scmp.lt.s32.totalorder %s17, 1
        %s126 = scalar_select %p125, %s17, 1
        %s127 = smul.addr %s124, 2
        %s128 = sadd.s32 %s126, %s127
        %s129 = smul.addr %s128, 8
        %s130 = scalar_lea.vmem %s1, %s129
      $region24: #{_uniform_forward.1} parent=19 // pred_fallthru
        _
    $region20: #{_uniform_forward.1} parent=5 // pred_fallthru
      _
    %p131 = scmp.le.s32.totalorder 1, %s9
    %p132 = scmp.lt.s32.totalorder %s9, 3
    %p133 = pnand %p131, %p132
    %p134 = pneg %p133
    // Predicated region
    $region25: #{_uniform_forward.1} parent=5 // pred_check
      _
    $region26: #{_uniform_forward.1} parent=5 // pred_check_branch
      %136 = sbr.rel (%p133) target = $region28
    $region27: #{_uniform_forward.1} parent=5 // pred_region
      %s137 = ssub.s32 %s9, 1
      %p138 = pneg %p42
      %p139 = pneg %p39
      %p140 = scmp.lt.s32.totalorder %s18, 0
      %s141 = scalar_select %p140, %s18, 0
      %p142 = scmp.lt.s32.totalorder %s19, 1
      %s143 = scalar_select %p142, %s19, 1
      %s144 = smul.addr %s141, 2
      %s145 = sadd.s32 %s143, %s144
      %s146 = smul.addr %s145, 8
      %s147 = scalar_lea.vmem %s1, %s146
      %p148 = pneg %p70
      %p149 = pneg %p67
      %p150 = pneg %p98
      %p151 = pneg %p95
      %p152 = scmp.lt.s32.totalorder %s18, 0
      %s153 = scalar_select %p152, %s18, 0
      %p154 = scmp.lt.s32.totalorder %s19, 1
      %s155 = scalar_select %p154, %s19, 1
      %s156 = smul.addr %s153, 2
      %s157 = sadd.s32 %s155, %s156
      %s158 = smul.addr %s157, 8
      %s159 = scalar_lea.vmem %s2, %s158
      %p160 = scmp.lt.s32.totalorder %s18, 0
      %s161 = scalar_select %p160, %s18, 0
      %p162 = scmp.lt.s32.totalorder %s19, 1
      %s163 = scalar_select %p162, %s19, 1
      %s164 = smul.addr %s161, 2
      %s165 = sadd.s32 %s163, %s164
      %s166 = smul.addr %s165, 8
      %s167 = scalar_lea.vmem %s1, %s166
      %p168 = scmp.lt.s32.totalorder %s18, 0
      %s169 = scalar_select %p168, %s18, 0
      %p170 = scmp.lt.s32.totalorder %s19, 1
      %s171 = scalar_select %p170, %s19, 1
      %s172 = smul.addr %s169, 2
      %s173 = sadd.s32 %s171, %s172
      %s174 = smul.addr %s173, 8
      %s175 = scalar_lea.vmem %s2, %s174
      %s176 = sld [smem:[#allocation2]]
      %v177 = vld [vmem:[%s167] sm:$0xff]
      %v178 = vstv %s176
      %v179 = vmul.f32 %v177, %v178
      %180 = vst [vmem:[%s175] sm:$0xff] %v179
      %p181 = scmp.lt.s32.totalorder %s18, 0
      %s182 = scalar_select %p181, %s18, 0
      %p183 = scmp.lt.s32.totalorder %s19, 1
      %s184 = scalar_select %p183, %s19, 1
      %s185 = smul.addr %s182, 2
      %s186 = sadd.s32 %s184, %s185
      %s187 = smul.addr %s186, 8
      %s188 = scalar_lea.vmem %s2, %s187
      // Predicated region
      $region29: #{_uniform_forward.1} parent=27 // pred_check
        %p189 = pneg %p95
      $region30: #{_uniform_forward.1} parent=27 // pred_check_branch
        %191 = sbr.rel (%p189) target = $region32
      $region31: #{_uniform_forward.1} parent=27 // pred_region
        _
      $region32: #{_uniform_forward.1} parent=27 // pred_fallthru
        _
    $region28: #{_uniform_forward.1} parent=5 // pred_fallthru
      _
    %p192 = scmp.le.s32.totalorder 2, %s9
    // Predicated region
    $region33: #{_uniform_forward.1} parent=5 // pred_check
      %p193 = pneg %p192
    $region34: #{_uniform_forward.1} parent=5 // pred_check_branch
      %195 = sbr.rel (%p193) target = $region36
    $region35: #{_uniform_forward.1} parent=5 // pred_region
      %s196 = ssub.s32 %s9, 2
      // Predicated region
      $region37: #{_uniform_forward.1} parent=35 // pred_check
        %p197 = pneg %p101
      $region38: #{_uniform_forward.1} parent=35 // pred_check_branch
        %199 = sbr.rel (%p197) target = $region40
      $region39: #{_uniform_forward.1} parent=35 // pred_region
        %p200 = scmp.lt.s32.totalorder %s20, 0
        %s201 = scalar_select %p200, %s20, 0
        %p202 = scmp.lt.s32.totalorder %s21, 1
        %s203 = scalar_select %p202, %s21, 1
        %s204 = smul.addr %s201, 2
        %s205 = sadd.s32 %s203, %s204
        %s206 = smul.addr %s205, 8
        %s207 = scalar_lea.vmem %s2, %s206
      $region40: #{_uniform_forward.1} parent=35 // pred_fallthru
        _
    $region36: #{_uniform_forward.1} parent=5 // pred_fallthru
      _
  $region6: #{_uniform_forward.1} parent=0 // loop_footer
    %s13 = sadd.s32 1, %s9
  $region7: #{_uniform_forward.1} parent=0 // loop_footer_branch
    %8 = sbr.rel target = $region3
  $region8: #{_uniform_forward.1} parent=0 // loop_exit
    _

</llo_original>
